<compile_context>
chip_gen: v5e
topology: v5e:2x2
jax: 0.10.0
libtpu: 0.0.40
codegen_flags: <defaults>
</compile_context>

<pallas_src>
import functools

import jax
import jax.numpy as jnp
from jax import lax
from jax.experimental import pallas as pl
from jax.experimental.pallas import tpu as pltpu

_LANE = 128
_SUBLANE = 8
_BLOCK_BUDGET_BYTES = 4 << 20          # per x (or t) block; v7x-VMEM safe
_VMEM_LIMIT_BYTES = 48 * 1024 * 1024   # > default scoped limit, < v7x 64 MiB


# ---------------------------------------------------------------------------
# Primary kernel: inputs viewed as (N, C, S, 128), S = H*W // 128.
# Grid = (N, P, G); P is a 2-way spatial split used only when N == 1.
# ---------------------------------------------------------------------------
def _masked_l1_kernel_4d(x_ref, t_ref, m_ref, out_ref, *, n_chan, s_total,
                         rows_per_block, row_chunk, acc_rows):
    p = pl.program_id(1)
    g = pl.program_id(2)
    num_g = pl.num_programs(2)

    @pl.when(g == 0)
    def _init():
        out_ref[...] = jnp.zeros_like(out_ref)

    block_row0 = (p * num_g + g) * rows_per_block
    # Hoisted (constant) iota; only the scalar offset changes per chunk.
    row_iota = lax.broadcasted_iota(jnp.int32, (row_chunk, _LANE), 0)
    n_folds = row_chunk // acc_rows

    def body(j, acc):
        r0 = pl.multiple_of(j * row_chunk, row_chunk)
        mv = m_ref[0, 0, pl.ds(r0, row_chunk), :].astype(jnp.float32)   # (RC,128)
        d = jnp.zeros((row_chunk, _LANE), jnp.float32)
        for c in range(n_chan):                                         # static, small C
            xc = x_ref[0, c, pl.ds(r0, row_chunk), :].astype(jnp.float32)
            tc = t_ref[0, c, pl.ds(r0, row_chunk), :].astype(jnp.float32)
            d = d + jnp.abs(xc * mv - tc * mv)
        # Zero rows that lie past the true spatial extent (ragged last block
        # and phantom steps from the P split read garbage there).
        valid = (block_row0 + r0 + row_iota) < s_total
        d = jnp.where(valid, d, 0.0)
        folded = d[0:acc_rows, :]
        for k in range(1, n_folds):                                      # vreg-aligned slices
            folded = folded + d[k * acc_rows:(k + 1) * acc_rows, :]
        return acc + folded

    trips = rows_per_block // row_chunk
    acc = lax.fori_loop(0, trips, body,
                        jnp.zeros((acc_rows, _LANE), jnp.float32),
                        unroll=min(2, trips))
    out_ref[...] = out_ref[...] + acc[None, None]


def _plan_rows(s_rows, n_chan, itemsize, batch):
    """Rows-per-block / chunking for the (N, C, S, 128) layout."""
    if s_rows < _SUBLANE:
        return s_rows, s_rows, s_rows, 1, 1
    acc_rows = _SUBLANE
    r_budget = max(_SUBLANE,
                   (_BLOCK_BUDGET_BYTES // (n_chan * _LANE * itemsize))
                   // _SUBLANE * _SUBLANE)
    s8 = (s_rows // _SUBLANE) * _SUBLANE
    rows = min(r_budget, s8)
    if batch == 1 and s8 >= 2 * _SUBLANE:
        # Ensure >= 2 spatial tiles so both v7x TensorCores get work.
        half8 = pl.cdiv(pl.cdiv(s_rows, 2), _SUBLANE) * _SUBLANE
        rows = min(rows, max(_SUBLANE, half8))
    for rc in (32, 16, 8):
        if rows % rc == 0:
            row_chunk = rc
            break
    n_row_tiles = pl.cdiv(s_rows, rows)
    p_split = 2 if (batch == 1 and n_row_tiles >= 2) else 1
    return rows, row_chunk, acc_rows, n_row_tiles, p_split


def _run_4d(x4, t4, m4):
    n, c, s, _ = x4.shape
    itemsize = jnp.dtype(x4.dtype).itemsize
    rows, row_chunk, acc_rows, n_tiles, p_split = _plan_rows(s, c, itemsize, n)
    g_steps = pl.cdiv(n_tiles, p_split)

    def in_map(ni, pi, gi):
        # Clamp keeps phantom steps (from the P split) in-bounds; their
        # contribution is zeroed by the in-kernel row mask.
        return (ni, 0, jnp.minimum(pi * g_steps + gi, n_tiles - 1), 0)

    kernel = functools.partial(_masked_l1_kernel_4d, n_chan=c, s_total=s,
                               rows_per_block=rows, row_chunk=row_chunk,
                               acc_rows=acc_rows)
    return pl.pallas_call(
        kernel,
        out_shape=jax.ShapeDtypeStruct((n, p_split, acc_rows, _LANE), jnp.float32),
        grid_spec=pltpu.PrefetchScalarGridSpec(
            num_scalar_prefetch=0,
            grid=(n, p_split, g_steps),
            in_specs=[
                pl.BlockSpec((1, c, rows, _LANE), in_map),
                pl.BlockSpec((1, c, rows, _LANE), in_map),
                pl.BlockSpec((1, 1, rows, _LANE), in_map),
            ],
            out_specs=pl.BlockSpec((1, 1, acc_rows, _LANE),
                                   lambda ni, pi, gi: (ni, pi, 0, 0)),
        ),
        compiler_params=pltpu.CompilerParams(
            dimension_semantics=("parallel", "parallel", "arbitrary"),
            vmem_limit_bytes=_VMEM_LIMIT_BYTES),
    )(x4, t4, m4)


# ---------------------------------------------------------------------------
# Fallback kernel for ragged H*W (hw % 128 != 0, hw >= 128): (N, C, hw) layout.
# ---------------------------------------------------------------------------
def _masked_l1_kernel_3d(x_ref, t_ref, m_ref, out_ref, *, hw_total, tile,
                         lane_chunk):
    p = pl.program_id(1)
    g = pl.program_id(2)
    num_g = pl.num_programs(2)

    @pl.when(g == 0)
    def _init():
        out_ref[...] = jnp.zeros_like(out_ref)

    base = (p * num_g + g) * tile
    lane_iota = lax.broadcasted_iota(jnp.int32, (1, lane_chunk), 1)
    n_folds = lane_chunk // _LANE

    def body(j, acc):
        off = pl.multiple_of(j * lane_chunk, lane_chunk)
        xv = x_ref[0, :, pl.ds(off, lane_chunk)].astype(jnp.float32)    # (C, LC)
        tv = t_ref[0, :, pl.ds(off, lane_chunk)].astype(jnp.float32)
        mv = m_ref[0, :, pl.ds(off, lane_chunk)].astype(jnp.float32)    # (1, LC)
        d = jnp.abs(xv * mv - tv * mv)
        valid = (base + off + lane_iota) < hw_total                     # (1, LC)
        d = jnp.where(valid, d, 0.0)
        folded = d[:, 0:_LANE]
        for k in range(1, n_folds):                                     # 128-aligned slices
            folded = folded + d[:, k * _LANE:(k + 1) * _LANE]
        return acc + folded

    trips = tile // lane_chunk
    acc = lax.fori_loop(0, trips, body,
                        jnp.zeros((out_ref.shape[2], _LANE), jnp.float32),
                        unroll=min(2, trips))
    out_ref[...] = out_ref[...] + acc[None, None]


def _plan_lanes(hw, n_chan, itemsize, batch):
    """Tile/chunking for the ragged (N, C, hw) layout."""
    if n_chan <= 16:
        lc0 = 512
    elif n_chan <= 32:
        lc0 = 256
    else:
        lc0 = 128
    lc = min(lc0, (hw // _LANE) * _LANE)
    hw_floor = (hw // lc) * lc
    t_budget = max(lc, (_BLOCK_BUDGET_BYTES // (n_chan * itemsize)) // lc * lc)
    t_cap = min(t_budget, hw_floor)
    n_tiles = pl.cdiv(hw, t_cap)
    if batch == 1:
        n_tiles = max(n_tiles, 2)          # keep both v7x TensorCores busy
    tile = min(pl.cdiv(pl.cdiv(hw, n_tiles), lc) * lc, hw_floor)
    n_tiles = pl.cdiv(hw, tile)
    p_split = 2 if (batch == 1 and n_tiles >= 2) else 1
    return tile, lc, n_tiles, p_split


def _run_3d(x2, t2, m2):
    n, c, hw = x2.shape
    itemsize = jnp.dtype(x2.dtype).itemsize
    tile, lane_chunk, n_tiles, p_split = _plan_lanes(hw, c, itemsize, n)
    g_steps = pl.cdiv(n_tiles, p_split)

    def in_map(ni, pi, gi):
        return (ni, 0, jnp.minimum(pi * g_steps + gi, n_tiles - 1))

    kernel = functools.partial(_masked_l1_kernel_3d, hw_total=hw, tile=tile,
                               lane_chunk=lane_chunk)
    return pl.pallas_call(
        kernel,
        out_shape=jax.ShapeDtypeStruct((n, p_split, c, _LANE), jnp.float32),
        grid_spec=pltpu.PrefetchScalarGridSpec(
            num_scalar_prefetch=0,
            grid=(n, p_split, g_steps),
            in_specs=[
                pl.BlockSpec((1, c, tile), in_map),
                pl.BlockSpec((1, c, tile), in_map),
                pl.BlockSpec((1, 1, tile), in_map),
            ],
            out_specs=pl.BlockSpec((1, 1, c, _LANE),
                                   lambda ni, pi, gi: (ni, pi, 0, 0)),
        ),
        compiler_params=pltpu.CompilerParams(
            dimension_semantics=("parallel", "parallel", "arbitrary"),
            vmem_limit_bytes=_VMEM_LIMIT_BYTES),
    )(x2, t2, m2)


# ---------------------------------------------------------------------------
# Public wrapper (forward pass of MaskedL1Loss).
# ---------------------------------------------------------------------------
def masked_l1_loss(x, target, mask):
    """x, target: (N, C, H, W); mask: (N, 1, H, W).  Returns scalar f32 mean."""
    N, C, H, W = x.shape
    assert target.shape == (N, C, H, W)
    assert mask.shape == (N, 1, H, W)
    hw = H * W
    inv_count = 1.0 / float(N * C * hw)

    if hw % _LANE == 0:
        # Zero-copy, sublane-dense view.
        partials = _run_4d(x.reshape(N, C, hw // _LANE, _LANE),
                           target.reshape(N, C, hw // _LANE, _LANE),
                           mask.reshape(N, 1, hw // _LANE, _LANE))
    elif hw >= _LANE:
        # Zero-copy ragged path; tail lanes masked in-kernel.
        partials = _run_3d(x.reshape(N, C, hw),
                           target.reshape(N, C, hw),
                           mask.reshape(N, 1, hw))
    else:
        # Degenerate tiny images: a <1 KiB pad is cheaper than a 3rd code path.
        pad = ((0, 0), (0, 0), (0, _LANE - hw))
        partials = _run_4d(
            jnp.pad(x.reshape(N, C, hw), pad).reshape(N, C, 1, _LANE),
            jnp.pad(target.reshape(N, C, hw), pad).reshape(N, C, 1, _LANE),
            jnp.pad(mask.reshape(N, 1, hw), pad).reshape(N, 1, 1, _LANE))

    return jnp.sum(partials) * inv_count


if __name__ == "__main__":
    def _ref(x, t, m):
        me = jnp.broadcast_to(m, x.shape)
        return jnp.mean(jnp.abs(x * me - t * me))

    key = jax.random.PRNGKey(0)
    cases = [
        (2, 4, 16, 16),   # primary 4D path, S=2 (< 8 sublanes)
        (1, 3, 64, 64),   # 4D path, S=32, N=1 -> 2-way parallel spatial split
        (1, 3, 12, 15),   # ragged hw=180 -> zero-copy 3D fallback, masked tail
    ]
    for (n, c, h, w) in cases:
        key, kx, kt, km = jax.random.split(key, 4)
        x = jax.random.normal(kx, (n, c, h, w), dtype=jnp.float32)
        t = jax.random.normal(kt, (n, c, h, w), dtype=jnp.float32)
        m = (jax.random.uniform(km, (n, 1, h, w)) > 0.5).astype(jnp.float32)

        got = jax.block_until_ready(masked_l1_loss(x, t, m))
        want = _ref(x, t, m)
        assert jnp.allclose(got, want, rtol=1e-5, atol=1e-6), ((n, c, h, w), got, want)

    print("KERNEL_OK")
</pallas_src>

<mosaic_0001>
module attributes {stable_mosaic.version = 11 : i64} {
  func.func @_masked_l1_kernel_4d(%arg0: i32, %arg1: i32, %arg2: i32, %arg3: memref<1x4x2x128xf32, #tpu.memory_space<vmem>>, %arg4: memref<1x4x2x128xf32, #tpu.memory_space<vmem>>, %arg5: memref<1x1x2x128xf32, #tpu.memory_space<vmem>>, %arg6: memref<1x1x2x128xf32, #tpu.memory_space<vmem>>) attributes {dimension_semantics = [#tpu.dimension_semantics<parallel>, #tpu.dimension_semantics<parallel>, #tpu.dimension_semantics<arbitrary>], iteration_bounds = array<i64: 2, 1, 1>, scalar_prefetch = 0 : i64, scratch_operands = 0 : i64, tpu.core_type = #tpu.core_type<tc>, window_params = [{transform_indices = @transform_0, window_bounds = array<i64: 1, 4, 2, 128>}, {transform_indices = @transform_1, window_bounds = array<i64: 1, 4, 2, 128>}, {transform_indices = @transform_2, window_bounds = array<i64: 1, 1, 2, 128>}, {transform_indices = @transform_3, window_bounds = array<i64: 1, 1, 2, 128>}]} {
    %c0_i32 = arith.constant 0 : i32
    %0 = arith.cmpi eq, %arg2, %c0_i32 : i32
    %1 = arith.extui %0 : i1 to i32
    %c0_i32_0 = arith.constant 0 : i32
    %2 = arith.cmpi ne, %1, %c0_i32_0 : i32
    scf.if %2 {
      %cst_38 = arith.constant 0.000000e+00 : f32
      %70 = vector.broadcast %cst_38 : f32 to vector<1x1x2x128xf32>
      %c0_39 = arith.constant 0 : index
      %c0_40 = arith.constant 0 : index
      %c0_41 = arith.constant 0 : index
      %c0_42 = arith.constant 0 : index
      %71 = vector.load %arg6[%c0_39, %c0_40, %c0_41, %c0_42] : memref<1x1x2x128xf32, #tpu.memory_space<vmem>>, vector<1x1x2x128xf32>
      tpu.vector_store %arg6[%c0_39, %c0_40, %c0_41, %c0_42], %70 {strides = array<i32>} : memref<1x1x2x128xf32, #tpu.memory_space<vmem>>, vector<1x1x2x128xf32>,
    } else {
    }
    %c1_i32 = arith.constant 1 : i32
    %3 = arith.muli %arg1, %c1_i32 : i32
    %4 = arith.addi %3, %arg2 : i32
    %c2_i32 = arith.constant 2 : i32
    %5 = arith.muli %4, %c2_i32 : i32
    %6 = tpu.iota {dimensions = array<i32: 0>} : vector<2x128xi32>
    %cst = arith.constant 0.000000e+00 : f32
    %7 = vector.broadcast %cst : f32 to vector<2x128xf32>
    %c0_i32_1 = arith.constant 0 : i32
    %c2_i32_2 = arith.constant 2 : i32
    %8 = arith.muli %c0_i32_1, %c2_i32_2 : i32
    %9 = tpu.assume_multiple %8, 2 : i32
    %c0 = arith.constant 0 : index
    %c0_3 = arith.constant 0 : index
    %10 = arith.index_cast %9 : i32 to index
    %c0_4 = arith.constant 0 : index
    %11 = vector.load %arg5[%c0, %c0_3, %10, %c0_4] : memref<1x1x2x128xf32, #tpu.memory_space<vmem>>, vector<1x1x2x128xf32>
    %12 = vector.shape_cast %11 : vector<1x1x2x128xf32> to vector<2x128xf32>
    %cst_5 = arith.constant 0.000000e+00 : f32
    %13 = vector.broadcast %cst_5 : f32 to vector<2x128xf32>
    %c0_6 = arith.constant 0 : index
    %c0_7 = arith.constant 0 : index
    %14 = arith.index_cast %9 : i32 to index
    %c0_8 = arith.constant 0 : index
    %15 = vector.load %arg3[%c0_6, %c0_7, %14, %c0_8] : memref<1x4x2x128xf32, #tpu.memory_space<vmem>>, vector<1x1x2x128xf32>
    %16 = vector.shape_cast %15 : vector<1x1x2x128xf32> to vector<2x128xf32>
    %c0_9 = arith.constant 0 : index
    %c0_10 = arith.constant 0 : index
    %17 = arith.index_cast %9 : i32 to index
    %c0_11 = arith.constant 0 : index
    %18 = vector.load %arg4[%c0_9, %c0_10, %17, %c0_11] : memref<1x4x2x128xf32, #tpu.memory_space<vmem>>, vector<1x1x2x128xf32>
    %19 = vector.shape_cast %18 : vector<1x1x2x128xf32> to vector<2x128xf32>
    %20 = arith.mulf %16, %12 : vector<2x128xf32>
    %21 = arith.mulf %19, %12 : vector<2x128xf32>
    %22 = arith.subf %20, %21 : vector<2x128xf32>
    %23 = math.absf %22 : vector<2x128xf32>
    %24 = arith.addf %13, %23 : vector<2x128xf32>
    %c0_12 = arith.constant 0 : index
    %c1 = arith.constant 1 : index
    %25 = arith.index_cast %9 : i32 to index
    %c0_13 = arith.constant 0 : index
    %26 = vector.load %arg3[%c0_12, %c1, %25, %c0_13] : memref<1x4x2x128xf32, #tpu.memory_space<vmem>>, vector<1x1x2x128xf32>
    %27 = vector.shape_cast %26 : vector<1x1x2x128xf32> to vector<2x128xf32>
    %c0_14 = arith.constant 0 : index
    %c1_15 = arith.constant 1 : index
    %28 = arith.index_cast %9 : i32 to index
    %c0_16 = arith.constant 0 : index
    %29 = vector.load %arg4[%c0_14, %c1_15, %28, %c0_16] : memref<1x4x2x128xf32, #tpu.memory_space<vmem>>, vector<1x1x2x128xf32>
    %30 = vector.shape_cast %29 : vector<1x1x2x128xf32> to vector<2x128xf32>
    %31 = arith.mulf %27, %12 : vector<2x128xf32>
    %32 = arith.mulf %30, %12 : vector<2x128xf32>
    %33 = arith.subf %31, %32 : vector<2x128xf32>
    %34 = math.absf %33 : vector<2x128xf32>
    %35 = arith.addf %24, %34 : vector<2x128xf32>
    %c0_17 = arith.constant 0 : index
    %c2 = arith.constant 2 : index
    %36 = arith.index_cast %9 : i32 to index
    %c0_18 = arith.constant 0 : index
    %37 = vector.load %arg3[%c0_17, %c2, %36, %c0_18] : memref<1x4x2x128xf32, #tpu.memory_space<vmem>>, vector<1x1x2x128xf32>
    %38 = vector.shape_cast %37 : vector<1x1x2x128xf32> to vector<2x128xf32>
    %c0_19 = arith.constant 0 : index
    %c2_20 = arith.constant 2 : index
    %39 = arith.index_cast %9 : i32 to index
    %c0_21 = arith.constant 0 : index
    %40 = vector.load %arg4[%c0_19, %c2_20, %39, %c0_21] : memref<1x4x2x128xf32, #tpu.memory_space<vmem>>, vector<1x1x2x128xf32>
    %41 = vector.shape_cast %40 : vector<1x1x2x128xf32> to vector<2x128xf32>
    %42 = arith.mulf %38, %12 : vector<2x128xf32>
    %43 = arith.mulf %41, %12 : vector<2x128xf32>
    %44 = arith.subf %42, %43 : vector<2x128xf32>
    %45 = math.absf %44 : vector<2x128xf32>
    %46 = arith.addf %35, %45 : vector<2x128xf32>
    %c0_22 = arith.constant 0 : index
    %c3 = arith.constant 3 : index
    %47 = arith.index_cast %9 : i32 to index
    %c0_23 = arith.constant 0 : index
    %48 = vector.load %arg3[%c0_22, %c3, %47, %c0_23] : memref<1x4x2x128xf32, #tpu.memory_space<vmem>>, vector<1x1x2x128xf32>
    %49 = vector.shape_cast %48 : vector<1x1x2x128xf32> to vector<2x128xf32>
    %c0_24 = arith.constant 0 : index
    %c3_25 = arith.constant 3 : index
    %50 = arith.index_cast %9 : i32 to index
    %c0_26 = arith.constant 0 : index
    %51 = vector.load %arg4[%c0_24, %c3_25, %50, %c0_26] : memref<1x4x2x128xf32, #tpu.memory_space<vmem>>, vector<1x1x2x128xf32>
    %52 = vector.shape_cast %51 : vector<1x1x2x128xf32> to vector<2x128xf32>
    %53 = arith.mulf %49, %12 : vector<2x128xf32>
    %54 = arith.mulf %52, %12 : vector<2x128xf32>
    %55 = arith.subf %53, %54 : vector<2x128xf32>
    %56 = math.absf %55 : vector<2x128xf32>
    %57 = arith.addf %46, %56 : vector<2x128xf32>
    %58 = arith.addi %5, %9 : i32
    %59 = vector.broadcast %58 : i32 to vector<2x128xi32>
    %60 = arith.addi %59, %6 : vector<2x128xi32>
    %c2_i32_27 = arith.constant 2 : i32
    %61 = vector.broadcast %c2_i32_27 : i32 to vector<2x128xi32>
    %62 = arith.cmpi slt, %60, %61 : vector<2x128xi32>
    %cst_28 = arith.constant 0.000000e+00 : f32
    %63 = vector.broadcast %cst_28 : f32 to vector<2x128xf32>
    %64 = arith.select %62, %57, %63 : vector<2x128xi1>, vector<2x128xf32>
    %65 = arith.addf %7, %64 : vector<2x128xf32>
    %c1_i32_29 = arith.constant 1 : i32
    %c0_30 = arith.constant 0 : index
    %c0_31 = arith.constant 0 : index
    %c0_32 = arith.constant 0 : index
    %c0_33 = arith.constant 0 : index
    %66 = vector.load %arg6[%c0_30, %c0_31, %c0_32, %c0_33] : memref<1x1x2x128xf32, #tpu.memory_space<vmem>>, vector<1x1x2x128xf32>
    %67 = vector.shape_cast %65 : vector<2x128xf32> to vector<1x1x2x128xf32>
    %68 = arith.addf %66, %67 : vector<1x1x2x128xf32>
    %c0_34 = arith.constant 0 : index
    %c0_35 = arith.constant 0 : index
    %c0_36 = arith.constant 0 : index
    %c0_37 = arith.constant 0 : index
    %69 = vector.load %arg6[%c0_34, %c0_35, %c0_36, %c0_37] : memref<1x1x2x128xf32, #tpu.memory_space<vmem>>, vector<1x1x2x128xf32>
    tpu.vector_store %arg6[%c0_34, %c0_35, %c0_36, %c0_37], %68 {strides = array<i32>} : memref<1x1x2x128xf32, #tpu.memory_space<vmem>>, vector<1x1x2x128xf32>,
    return
  }
  func.func @transform_0(%arg0: i32, %arg1: i32, %arg2: i32) -> (i32, i32, i32, i32) {
    %c1_i32 = arith.constant 1 : i32
    %0 = arith.muli %arg1, %c1_i32 : i32
    %1 = arith.addi %0, %arg2 : i32
    %c0_i32 = arith.constant 0 : i32
    %2 = arith.minsi %1, %c0_i32 : i32
    %c0_i32_0 = arith.constant 0 : i32
    %c0_i32_1 = arith.constant 0 : i32
    %c0_i32_2 = arith.constant 0 : i32
    return %arg0, %c0_i32_0, %2, %c0_i32_1 : i32, i32, i32, i32
  }
  func.func @transform_1(%arg0: i32, %arg1: i32, %arg2: i32) -> (i32, i32, i32, i32) {
    %c1_i32 = arith.constant 1 : i32
    %0 = arith.muli %arg1, %c1_i32 : i32
    %1 = arith.addi %0, %arg2 : i32
    %c0_i32 = arith.constant 0 : i32
    %2 = arith.minsi %1, %c0_i32 : i32
    %c0_i32_0 = arith.constant 0 : i32
    %c0_i32_1 = arith.constant 0 : i32
    %c0_i32_2 = arith.constant 0 : i32
    return %arg0, %c0_i32_0, %2, %c0_i32_1 : i32, i32, i32, i32
  }
  func.func @transform_2(%arg0: i32, %arg1: i32, %arg2: i32) -> (i32, i32, i32, i32) {
    %c1_i32 = arith.constant 1 : i32
    %0 = arith.muli %arg1, %c1_i32 : i32
    %1 = arith.addi %0, %arg2 : i32
    %c0_i32 = arith.constant 0 : i32
    %2 = arith.minsi %1, %c0_i32 : i32
    %c0_i32_0 = arith.constant 0 : i32
    %c0_i32_1 = arith.constant 0 : i32
    %c0_i32_2 = arith.constant 0 : i32
    return %arg0, %c0_i32_0, %2, %c0_i32_1 : i32, i32, i32, i32
  }
  func.func @transform_3(%arg0: i32, %arg1: i32, %arg2: i32) -> (i32, i32, i32, i32) {
    %c0_i32 = arith.constant 0 : i32
    %c0_i32_0 = arith.constant 0 : i32
    %c0_i32_1 = arith.constant 0 : i32
    return %arg0, %arg1, %c0_i32, %c0_i32_0 : i32, i32, i32, i32
  }
}

</mosaic_0001>

<llo_original>
// kernel: tpu_custom_call.1
$region0: #{tpu_custom_call.1}
  #allocation0 [shape = 'u32[]', space=smem, size = 0x4, offset = 0x4, fixed_abs, tag = 'smem constant byte address 0x4 - core index']
  #allocation1 [shape = 'u32[72,128]{1,0:T(1,128)}', space=vmem, size = 0x9000, scoped, tag = 'internal scratch']
  %s0 = inlined_call_operand.hbm [shape: f32[2,4,2,128], index: 0, kind: input, shape index: {}]
  %s1 = inlined_call_operand.hbm [shape: f32[2,4,2,128], index: 1, kind: input, shape index: {}]
  %s2 = inlined_call_operand.hbm [shape: f32[2,1,2,128], index: 2, kind: input, shape index: {}]
  %s3 = inlined_call_operand.hbm [shape: f32[2,1,2,128], index: 3, kind: output, shape index: {}]
  %s4 = sld [smem:[#allocation0]]
  $region61: #{tpu_custom_call.1} parent=0
    _
  %s6 = ssub.s32 1, %s4
  %s7 = scalar_select 0, %s6, %s4
  $region1: #{tpu_custom_call.1} parent=0
    #allocation2 [shape = 'u8[8192]{0}', space=vmem, size = 0x2000, scoped, tag = 'input window, operand 0']
    #allocation3 [shape = 's32[2]{0}', space=sflag, size = 0x8, scoped, tag = 'scoped memory for tpu_custom_call.1']
    #allocation4 [shape = 's32[2]{0}', space=sflag, size = 0x8, scoped, tag = 'scoped memory for tpu_custom_call.1']
    #allocation5 [shape = 'u8[8192]{0}', space=vmem, size = 0x2000, scoped, tag = 'input window, operand 1']
    #allocation6 [shape = 's32[2]{0}', space=sflag, size = 0x8, scoped, tag = 'scoped memory for tpu_custom_call.1']
    #allocation7 [shape = 'u8[2048]{0}', space=vmem, size = 0x800, scoped, tag = 'input window, operand 2']
    #allocation8 [shape = 'u8[2048]{0}', space=vmem, size = 0x800, scoped, tag = 'output window, operand 0']
    %8 = vsyncpa [#allocation3], 0
    %s9 = scalar_lea.sflag [#allocation3], 1
    %10 = vsyncpa %s9, 0
    %11 = vsyncpa [#allocation6], 0
    %s12 = scalar_lea.sflag [#allocation6], 1
    %13 = vsyncpa %s12, 0
    %14 = vsyncpa [#allocation4], 0
    %s15 = scalar_lea.sflag [#allocation4], 1
    %16 = vsyncpa %s15, 0
    loop: start=0, step=1, limit=4
    $region2: #{tpu_custom_call.1} parent=1 // loop_pre_header
      _
    $region3: #{tpu_custom_call.1} parent=1 // loop_header
      %s18 = sphi 0, %s22
      %p19 = scmp.ge.s32.totalorder %s18, 4
      %s25 = sphi 0, %s44
      %s26 = sphi 0, %s40
      %s27 = sphi 0, %s36
      %s28 = sphi 0, %s25
      %s29 = sphi 0, %s26
      %s30 = sphi 0, %s27
      %s31 = sphi 0, %s28
      %s32 = sphi 0, %s29
      %s33 = sphi 0, %s30
      %s55 = sphi 0, %s57
      %s58 = sphi 0, %s55
      %s59 = sphi 0, %s58
      %s75 = sphi 0, %s59
      %s89 = sphi 0, %s91
      %s92 = sphi 0, %s89
      %s93 = sphi 0, %s92
      %s109 = sphi 0, %s93
      %s123 = sphi 0, %s125
      %s126 = sphi 0, %s123
      %s127 = sphi 0, %s126
      %s143 = sphi 0, %s127
      %s151 = sphi 0, %s153
      %s154 = sphi 0, %s151
      %s155 = sphi 0, %s154
      %s171 = sphi 0, %s155
    $region4: #{tpu_custom_call.1} parent=1 // loop_header_branch
      %21 = sbr.rel (%p19) target = $region8
    $region5: #{tpu_custom_call.1} parent=1 // loop_body
      %s23 = ssub.s32 %s18, 1
      %s24 = ssub.s32 %s18, 2
      %s34 = sadd.s32 1, %s27
      %p35 = scmp.ge.s32.totalorder %s34, 1
      %s36 = scalar_select %p35, 0, %s34
      %s37 = sadd.s32 1, %s26
      %s38 = scalar_select %p35, %s37, %s26
      %p39 = scmp.ge.s32.totalorder %s38, 1
      %s40 = scalar_select %p39, 0, %s38
      %s41 = sadd.s32 1, %s25
      %s42 = scalar_select %p39, %s41, %s25
      %p43 = scmp.ge.s32.totalorder %s42, 2
      %s44 = scalar_select %p43, 0, %s42
      %s45 = sadd.s32 %s26, %s27
      %p46 = scmp.lt.s32.totalorder %s45, 0
      %s47 = scalar_select %p46, %s45, 0
      %s48 = sadd.s32 %s40, %s36
      %p49 = scmp.lt.s32.totalorder %s48, 0
      %s50 = scalar_select %p49, %s48, 0
      %s51 = ssub.s32 %s25, %s44
      %s52 = ssub.s32 %s47, %s50
      %s53 = sor.u32 %s51, %s52
      %p54 = scmp.eq.s32.totalorder %s53, 0
      %s56 = sadd.s32 %s55, 1
      %s57 = scalar_select %p54, %s55, %s56
      %p60 = pneg %p54
      %p61 = scmp.eq.s32.totalorder %s18, 1
      %p62 = por %p60, %p61
      %p63 = scmp.ne.s32.totalorder %s55, %s58
      %p64 = scmp.eq.s32.totalorder %s18, 0
      %p65 = por %p63, %p64
      %p66 = scmp.ne.s32.totalorder %s55, %s58
      %p67 = scmp.eq.s32.totalorder %s23, 1
      %p68 = por %p66, %p67
      %p69 = scmp.ne.s32.totalorder %s58, %s59
      %p70 = scmp.eq.s32.totalorder %s23, 0
      %p71 = por %p69, %p70
      %p72 = scmp.ne.s32.totalorder %s58, %s59
      %p73 = scmp.eq.s32.totalorder %s24, 1
      %p74 = por %p72, %p73
      %p76 = scmp.ne.s32.totalorder %s59, %s75
      %p77 = scmp.eq.s32.totalorder %s24, 0
      %p78 = por %p76, %p77
      %s79 = sadd.s32 %s26, %s27
      %p80 = scmp.lt.s32.totalorder %s79, 0
      %s81 = scalar_select %p80, %s79, 0
      %s82 = sadd.s32 %s40, %s36
      %p83 = scmp.lt.s32.totalorder %s82, 0
      %s84 = scalar_select %p83, %s82, 0
      %s85 = ssub.s32 %s25, %s44
      %s86 = ssub.s32 %s81, %s84
      %s87 = sor.u32 %s85, %s86
      %p88 = scmp.eq.s32.totalorder %s87, 0
      %s90 = sadd.s32 %s89, 1
      %s91 = scalar_select %p88, %s89, %s90
      %p94 = pneg %p88
      %p95 = scmp.eq.s32.totalorder %s18, 1
      %p96 = por %p94, %p95
      %p97 = scmp.ne.s32.totalorder %s89, %s92
      %p98 = scmp.eq.s32.totalorder %s18, 0
      %p99 = por %p97, %p98
      %p100 = scmp.ne.s32.totalorder %s89, %s92
      %p101 = scmp.eq.s32.totalorder %s23, 1
      %p102 = por %p100, %p101
      %p103 = scmp.ne.s32.totalorder %s92, %s93
      %p104 = scmp.eq.s32.totalorder %s23, 0
      %p105 = por %p103, %p104
      %p106 = scmp.ne.s32.totalorder %s92, %s93
      %p107 = scmp.eq.s32.totalorder %s24, 1
      %p108 = por %p106, %p107
      %p110 = scmp.ne.s32.totalorder %s93, %s109
      %p111 = scmp.eq.s32.totalorder %s24, 0
      %p112 = por %p110, %p111
      %s113 = sadd.s32 %s26, %s27
      %p114 = scmp.lt.s32.totalorder %s113, 0
      %s115 = scalar_select %p114, %s113, 0
      %s116 = sadd.s32 %s40, %s36
      %p117 = scmp.lt.s32.totalorder %s116, 0
      %s118 = scalar_select %p117, %s116, 0
      %s119 = ssub.s32 %s25, %s44
      %s120 = ssub.s32 %s115, %s118
      %s121 = sor.u32 %s119, %s120
      %p122 = scmp.eq.s32.totalorder %s121, 0
      %s124 = sadd.s32 %s123, 1
      %s125 = scalar_select %p122, %s123, %s124
      %p128 = pneg %p122
      %p129 = scmp.eq.s32.totalorder %s18, 1
      %p130 = por %p128, %p129
      %p131 = scmp.ne.s32.totalorder %s123, %s126
      %p132 = scmp.eq.s32.totalorder %s18, 0
      %p133 = por %p131, %p132
      %p134 = scmp.ne.s32.totalorder %s123, %s126
      %p135 = scmp.eq.s32.totalorder %s23, 1
      %p136 = por %p134, %p135
      %p137 = scmp.ne.s32.totalorder %s126, %s127
      %p138 = scmp.eq.s32.totalorder %s23, 0
      %p139 = por %p137, %p138
      %p140 = scmp.ne.s32.totalorder %s126, %s127
      %p141 = scmp.eq.s32.totalorder %s24, 1
      %p142 = por %p140, %p141
      %p144 = scmp.ne.s32.totalorder %s127, %s143
      %p145 = scmp.eq.s32.totalorder %s24, 0
      %p146 = por %p144, %p145
      %s147 = ssub.s32 %s25, %s44
      %s148 = ssub.s32 %s26, %s40
      %s149 = sor.u32 %s147, %s148
      %p150 = scmp.eq.s32.totalorder %s149, 0
      %s152 = sadd.s32 %s151, 1
      %s153 = scalar_select %p150, %s151, %s152
      %p156 = pneg %p150
      %p157 = scmp.eq.s32.totalorder %s18, 1
      %p158 = por %p156, %p157
      %p159 = scmp.ne.s32.totalorder %s151, %s154
      %p160 = scmp.eq.s32.totalorder %s18, 0
      %p161 = por %p159, %p160
      %p162 = scmp.ne.s32.totalorder %s151, %s154
      %p163 = scmp.eq.s32.totalorder %s23, 1
      %p164 = por %p162, %p163
      %p165 = scmp.ne.s32.totalorder %s154, %s155
      %p166 = scmp.eq.s32.totalorder %s23, 0
      %p167 = por %p165, %p166
      %p168 = scmp.ne.s32.totalorder %s154, %s155
      %p169 = scmp.eq.s32.totalorder %s24, 1
      %p170 = por %p168, %p169
      %p172 = scmp.ne.s32.totalorder %s155, %s171
      %p173 = scmp.eq.s32.totalorder %s24, 0
      %p174 = por %p172, %p173
      %p175 = scmp.le.s32.totalorder 1, %s18
      %p176 = scmp.lt.s32.totalorder %s18, 3
      %p177 = pnand %p175, %p176
      %p178 = pneg %p177
      // Predicated region
      $region9: #{tpu_custom_call.1} parent=5 // pred_check
        _
      $region10: #{tpu_custom_call.1} parent=5 // pred_check_branch
        %180 = sbr.rel (%p177) target = $region12
      $region11: #{tpu_custom_call.1} parent=5 // pred_region
        %s181 = ssub.s32 %s18, 1
      $region12: #{tpu_custom_call.1} parent=5 // pred_fallthru
        _
      %p182 = scmp.lt.s32.totalorder %s18, 2
      // Predicated region
      $region13: #{tpu_custom_call.1} parent=5 // pred_check
        %p183 = pneg %p182
      $region14: #{tpu_custom_call.1} parent=5 // pred_check_branch
        %185 = sbr.rel (%p183) target = $region16
      $region15: #{tpu_custom_call.1} parent=5 // pred_region
        // Predicated region
        $region17: #{tpu_custom_call.1} parent=15 // pred_check
          %p186 = pneg %p65
        $region18: #{tpu_custom_call.1} parent=15 // pred_check_branch
          %188 = sbr.rel (%p186) target = $region20
        $region19: #{tpu_custom_call.1} parent=15 // pred_region
          %s189 = sand.u32 %s55, 1
          %s190 = scalar_lea.sflag [#allocation3], %s189
          %s191 = sand.u32 %s55, 1
          %s192 = smul.addr %s191, 8
          %s193 = scalar_lea.vmem [#allocation2], %s192
          %s194 = sadd.s32 %s26, %s27
          %p195 = scmp.lt.s32.totalorder %s194, 0
          %s196 = scalar_select %p195, %s194, 0
          %198 = vsyncadd %s190, 0
          %s199 = smul.addr %s25, 4
          %s200 = sadd.s32 %s196, %s199
          %s201 = smul.addr %s200, 2
          %s202 = scalar_lea.hbm %s0, %s201
          %s203 = sshll.u32 %s202, 4
          %s204 = int_to_ptr.hbm [resolvable:$true] %s203
          %s205 = sshll.u32 %s193, 4
          %s206 = int_to_ptr.vmem [resolvable:$true] %s205
          %211 = dma.hbm_to_vmem [thread:$0]  %s204, 128, %s206, %s190, 32, 32, 2
        $region20: #{tpu_custom_call.1} parent=15 // pred_fallthru
          _
        // Predicated region
        $region21: #{tpu_custom_call.1} parent=15 // pred_check
          %p212 = pneg %p99
        $region22: #{tpu_custom_call.1} parent=15 // pred_check_branch
          %214 = sbr.rel (%p212) target = $region24
        $region23: #{tpu_custom_call.1} parent=15 // pred_region
          %s215 = sand.u32 %s18, 1
          %s216 = scalar_lea.sflag [#allocation6], %s215
          %s217 = sand.u32 %s89, 1
          %s218 = smul.addr %s217, 8
          %s219 = scalar_lea.vmem [#allocation5], %s218
          %s220 = sadd.s32 %s26, %s27
          %p221 = scmp.lt.s32.totalorder %s220, 0
          %s222 = scalar_select %p221, %s220, 0
          %224 = vsyncadd %s216, 0
          %s225 = smul.addr %s25, 4
          %s226 = sadd.s32 %s222, %s225
          %s227 = smul.addr %s226, 2
          %s228 = scalar_lea.hbm %s1, %s227
          %s229 = sshll.u32 %s228, 4
          %s230 = int_to_ptr.hbm [resolvable:$true] %s229
          %s231 = sshll.u32 %s219, 4
          %s232 = int_to_ptr.vmem [resolvable:$true] %s231
          %237 = dma.hbm_to_vmem [thread:$0]  %s230, 128, %s232, %s216, 32, 32, 2
        $region24: #{tpu_custom_call.1} parent=15 // pred_fallthru
          _
        // Predicated region
        $region25: #{tpu_custom_call.1} parent=15 // pred_check
          %p238 = pneg %p133
        $region26: #{tpu_custom_call.1} parent=15 // pred_check_branch
          %240 = sbr.rel (%p238) target = $region28
        $region27: #{tpu_custom_call.1} parent=15 // pred_region
          %s241 = sand.u32 %s18, 1
          %s242 = scalar_lea.sflag [#allocation6], %s241
          %s243 = sand.u32 %s123, 1
          %s244 = smul.addr %s243, 2
          %s245 = scalar_lea.vmem [#allocation7], %s244
          %s246 = sadd.s32 %s26, %s27
          %p247 = scmp.lt.s32.totalorder %s246, 0
          %s248 = scalar_select %p247, %s246, 0
          %250 = vsyncadd %s242, 0
          %s251 = sadd.s32 %s248, %s25
          %s252 = smul.addr %s251, 2
          %s253 = scalar_lea.hbm %s2, %s252
          %s255 = sshll.u32 %s253, 4
          %s256 = int_to_ptr.hbm [resolvable:$true] %s255
          %s257 = sshll.u32 %s245, 4
          %s258 = int_to_ptr.vmem [resolvable:$true] %s257
          %260 = dma.hbm_to_vmem [thread:$0]  %s256, 32, %s258, %s242
        $region28: #{tpu_custom_call.1} parent=15 // pred_fallthru
          _
      $region16: #{tpu_custom_call.1} parent=5 // pred_fallthru
        _
      %p261 = scmp.le.s32.totalorder 1, %s18
      %p262 = scmp.lt.s32.totalorder %s18, 3
      %p263 = pnand %p261, %p262
      %p264 = pneg %p263
      // Predicated region
      $region29: #{tpu_custom_call.1} parent=5 // pred_check
        _
      $region30: #{tpu_custom_call.1} parent=5 // pred_check_branch
        %266 = sbr.rel (%p263) target = $region32
      $region31: #{tpu_custom_call.1} parent=5 // pred_region
        %s267 = ssub.s32 %s18, 1
        %s268 = sand.u32 %s58, 1
        %s269 = scalar_lea.sflag [#allocation3], %s268
        %s270 = sand.u32 %s58, 1
        %s271 = smul.addr %s270, 8
        %s272 = scalar_lea.vmem [#allocation2], %s271
        // Predicated region
        $region33: #{tpu_custom_call.1} parent=31 // pred_check
          %p273 = pneg %p71
        $region34: #{tpu_custom_call.1} parent=31 // pred_check_branch
          %275 = sbr.rel (%p273) target = $region36
        $region35: #{tpu_custom_call.1} parent=31 // pred_region
          %277 = dma.done %s269, 128
        $region36: #{tpu_custom_call.1} parent=31 // pred_fallthru
          _
        %s278 = sand.u32 %s23, 1
        %s279 = scalar_lea.sflag [#allocation6], %s278
        %s280 = sand.u32 %s92, 1
        %s281 = smul.addr %s280, 8
        %s282 = scalar_lea.vmem [#allocation5], %s281
        // Predicated region
        $region37: #{tpu_custom_call.1} parent=31 // pred_check
          %p283 = pneg %p105
        $region38: #{tpu_custom_call.1} parent=31 // pred_check_branch
          %285 = sbr.rel (%p283) target = $region40
        $region39: #{tpu_custom_call.1} parent=31 // pred_region
          %287 = dma.done %s279, 128
        $region40: #{tpu_custom_call.1} parent=31 // pred_fallthru
          _
        %s288 = sand.u32 %s23, 1
        %s289 = scalar_lea.sflag [#allocation6], %s288
        %s290 = sand.u32 %s126, 1
        %s291 = smul.addr %s290, 2
        %s292 = scalar_lea.vmem [#allocation7], %s291
        // Predicated region
        $region41: #{tpu_custom_call.1} parent=31 // pred_check
          %p293 = pneg %p139
        $region42: #{tpu_custom_call.1} parent=31 // pred_check_branch
          %295 = sbr.rel (%p293) target = $region44
        $region43: #{tpu_custom_call.1} parent=31 // pred_region
          %297 = dma.done %s289, 32
        $region44: #{tpu_custom_call.1} parent=31 // pred_fallthru
          _
        %s298 = sand.u32 %s58, 1
        %s299 = scalar_lea.sflag [#allocation3], %s298
        %s300 = sand.u32 %s58, 1
        %s301 = smul.addr %s300, 8
        %s302 = scalar_lea.vmem [#allocation2], %s301
        %p303 = pneg %p71
        %p304 = pneg %p68
        %s305 = sand.u32 %s23, 1
        %s306 = scalar_lea.sflag [#allocation6], %s305
        %s307 = sand.u32 %s92, 1
        %s308 = smul.addr %s307, 8
        %s309 = scalar_lea.vmem [#allocation5], %s308
        %p310 = pneg %p105
        %p311 = pneg %p102
        %s312 = sand.u32 %s23, 1
        %s313 = scalar_lea.sflag [#allocation6], %s312
        %s314 = sand.u32 %s126, 1
        %s315 = smul.addr %s314, 2
        %s316 = scalar_lea.vmem [#allocation7], %s315
        %p317 = pneg %p139
        %p318 = pneg %p136
        %p319 = pneg %p167
        %p320 = pneg %p164
        %s321 = sand.u32 %s154, 1
        %s322 = scalar_lea.sflag [#allocation4], %s321
        %s323 = sand.u32 %s154, 1
        %s324 = smul.addr %s323, 2
        %s325 = scalar_lea.vmem [#allocation8], %s324
        %s326 = sadd.s32 %s29, %s30
        %p327 = scmp.lt.s32.totalorder %s326, 0
        %s328 = scalar_select %p327, %s326, 0
        %s329 = sadd.s32 %s29, %s30
        %p330 = scmp.lt.s32.totalorder %s329, 0
        %s331 = scalar_select %p330, %s329, 0
        %s332 = sadd.s32 %s29, %s30
        %p333 = scmp.lt.s32.totalorder %s332, 0
        %s334 = scalar_select %p333, %s332, 0
        %p335 = scmp.eq.s32.totalorder %s30, 0
        // Predicated region
        $region45: #{tpu_custom_call.1} parent=31 // pred_check
          %p336 = pneg %p335
        $region46: #{tpu_custom_call.1} parent=31 // pred_check_branch
          %338 = sbr.rel (%p336) target = $region48
        $region47: #{tpu_custom_call.1} parent=31 // pred_region
          %339 = vst [vmem:[%s325] sm:$0x3] 0.0
        $region48: #{tpu_custom_call.1} parent=31 // pred_fallthru
          _
        %s340 = sadd.s32 %s29, %s30
        %s341 = smul.u32 %s340, 2
        %v342 = vlaneseq
        %v343 = vshrl.u32 %v342, 7
        %v344 = vld [vmem:[%s292] sm:$0x3]
        %v345 = vld [vmem:[%s272] sm:$0x3]
        %v346 = vld [vmem:[%s282] sm:$0x3]
        %v347 = vmul.f32 %v345, %v344
        %v348 = vmul.f32 %v346, %v344
        %v349 = vsub.f32 %v347, %v348
        %v350 = vand.u32 2147483647, %v349
        %v351 = vadd.f32 %v350, 0.0
        %s352 = sadd.s32 0, 2
        %s353 = scalar_lea.vmem %s272, %s352 [#allocation2]
        %v354 = vld [vmem:[%s353] sm:$0x3]
        %s355 = scalar_lea.vmem %s282, %s352 [#allocation5]
        %v356 = vld [vmem:[%s355] sm:$0x3]
        %v357 = vmul.f32 %v354, %v344
        %v358 = vmul.f32 %v356, %v344
        %v359 = vsub.f32 %v357, %v358
        %v360 = vand.u32 2147483647, %v359
        %v361 = vadd.f32 %v351, %v360
        %s362 = sadd.s32 0, 4
        %s363 = scalar_lea.vmem %s272, %s362 [#allocation2]
        %v364 = vld [vmem:[%s363] sm:$0x3]
        %s365 = scalar_lea.vmem %s282, %s362 [#allocation5]
        %v366 = vld [vmem:[%s365] sm:$0x3]
        %v367 = vmul.f32 %v364, %v344
        %v368 = vmul.f32 %v366, %v344
        %v369 = vsub.f32 %v367, %v368
        %v370 = vand.u32 2147483647, %v369
        %v371 = vadd.f32 %v361, %v370
        %s372 = sadd.s32 0, 6
        %s373 = scalar_lea.vmem %s272, %s372 [#allocation2]
        %v374 = vld [vmem:[%s373] sm:$0x3]
        %s375 = scalar_lea.vmem %s282, %s372 [#allocation5]
        %v376 = vld [vmem:[%s375] sm:$0x3]
        %v377 = vmul.f32 %v374, %v344
        %v378 = vmul.f32 %v376, %v344
        %v379 = vsub.f32 %v377, %v378
        %v380 = vand.u32 2147483647, %v379
        %v381 = vadd.f32 %v371, %v380
        %s382 = sadd.s32 %s341, 0
        %v383 = vstv %s382
        %v384 = vadd.s32 %v383, %v343
        %vm385 = vcmp.lt.s32.totalorder %v384, 2
        %v386 = vsel %vm385, %v381, 0.0
        %v387 = vadd.f32 %v386, 0.0
        %v388 = vld [vmem:[%s325] sm:$0x3]
        %v389 = vadd.f32 %v388, %v387
        %390 = vst [vmem:[%s325] sm:$0x3] %v389
        %s391 = sand.u32 %s154, 1
        %s392 = scalar_lea.sflag [#allocation4], %s391
        %s393 = sand.u32 %s154, 1
        %s394 = smul.addr %s393, 2
        %s395 = scalar_lea.vmem [#allocation8], %s394
        // Predicated region
        $region49: #{tpu_custom_call.1} parent=31 // pred_check
          %p396 = pneg %p164
        $region50: #{tpu_custom_call.1} parent=31 // pred_check_branch
          %398 = sbr.rel (%p396) target = $region52
        $region51: #{tpu_custom_call.1} parent=31 // pred_region
          %400 = vsyncadd %s392, 0
          %s401 = sadd.s32 %s29, %s28
          %s402 = smul.addr %s401, 2
          %s403 = scalar_lea.hbm %s3, %s402
          %s405 = sshll.u32 %s395, 4
          %s406 = int_to_ptr.vmem [resolvable:$true] %s405
          %s407 = sshll.u32 %s403, 4
          %s408 = int_to_ptr.hbm [resolvable:$true] %s407
          %410 = dma.vmem_to_hbm [thread:$0]  %s406, 32, %s408, %s392
        $region52: #{tpu_custom_call.1} parent=31 // pred_fallthru
          _
      $region32: #{tpu_custom_call.1} parent=5 // pred_fallthru
        _
      %p411 = scmp.le.s32.totalorder 2, %s18
      // Predicated region
      $region53: #{tpu_custom_call.1} parent=5 // pred_check
        %p412 = pneg %p411
      $region54: #{tpu_custom_call.1} parent=5 // pred_check_branch
        %414 = sbr.rel (%p412) target = $region56
      $region55: #{tpu_custom_call.1} parent=5 // pred_region
        %s415 = ssub.s32 %s18, 2
        // Predicated region
        $region57: #{tpu_custom_call.1} parent=55 // pred_check
          %p416 = pneg %p170
        $region58: #{tpu_custom_call.1} parent=55 // pred_check_branch
          %418 = sbr.rel (%p416) target = $region60
        $region59: #{tpu_custom_call.1} parent=55 // pred_region
          %s419 = sand.u32 %s155, 1
          %s420 = scalar_lea.sflag [#allocation4], %s419
          %s421 = sand.u32 %s155, 1
          %s422 = smul.addr %s421, 2
          %s423 = scalar_lea.vmem [#allocation8], %s422
          %425 = dma.done %s420, 32
        $region60: #{tpu_custom_call.1} parent=55 // pred_fallthru
          _
      $region56: #{tpu_custom_call.1} parent=5 // pred_fallthru
        _
    $region6: #{tpu_custom_call.1} parent=1 // loop_footer
      %s22 = sadd.s32 1, %s18
    $region7: #{tpu_custom_call.1} parent=1 // loop_footer_branch
      %17 = sbr.rel target = $region3
    $region8: #{tpu_custom_call.1} parent=1 // loop_exit
      _
    %426 = vsyncpa [#allocation3], 1
    %s427 = scalar_lea.sflag [#allocation3], 1
    %428 = vsyncpa %s427, 1
    %429 = vsyncpa [#allocation6], 1
    %s430 = scalar_lea.sflag [#allocation6], 1
    %431 = vsyncpa %s430, 1
    %432 = vsyncpa [#allocation4], 1
    %s433 = scalar_lea.sflag [#allocation4], 1
    %434 = vsyncpa %s433, 1

</llo_original>
